<compile_context>
chip_gen: v5e
topology: v5e:2x2
jax: 0.10.0
libtpu: 0.0.40
codegen_flags: <defaults>
</compile_context>

<pallas_src>
import jax
import jax.numpy as jnp
import numpy as np
from jax.experimental import pallas as pl
from jax.experimental.pallas import tpu as pltpu

_LANE = 128
_SUBLANE = 8
# 4x tile (double-buffered input + output) must fit the smallest scoped-VMEM
# default (v5e: 16 MiB).  3 MiB tiles -> 12 MiB, plenty of headroom, and big
# enough to amortise the ~0.35 us per-grid-step overhead on every generation.
_TILE_BYTE_BUDGET = 3 * 1024 * 1024


def _desync_kernel(s_ref, o_ref):
    """Identity pass-through of one [rows, lanes] tile of packed bits."""
    # TODO(synk): insert actual stream desynchronization (pltpu.roll +
    #             VPU masks) here once the reference semantics exist.
    o_ref[...] = s_ref[...]


def _pick_aligned_tile(n, align, cap):
    """Largest multiple of `align` that divides n and is <= cap.

    Falls back to the full extent n (allowed as a full-array block) if n is
    not a multiple of `align`.
    """
    if n % align != 0:
        return n
    cap = max(align, min(n, (cap // align) * align))
    for t in range(cap, 0, -align):
        if n % t == 0:
            return t
    return align


def _select_tiles(r, l, itemsize, budget):
    """Pick (row_tile, lane_tile) for a [r, l] array within a byte budget."""
    # Row (sublane) tile: keep the full row extent unless one 128-lane column
    # of all rows already blows the byte budget.
    if r * _LANE * itemsize <= budget:
        tr = r
    else:
        max_tr = max(_SUBLANE, budget // (_LANE * itemsize))
        tr = _pick_aligned_tile(r, _SUBLANE, max_tr)

    # Lane tile: largest multiple of 128 dividing l within the byte budget
    # (lane-dense output stores are the biggest single store-path lever).
    max_tl = max(_LANE, budget // (tr * itemsize))
    tl = _pick_aligned_tile(l, _LANE, max_tl)

    # v7x: make sure there are >= 2 parallel grid steps so the second
    # TensorCore isn't idle; prefer splitting rows (keeps tl lane-dense).
    if (r // tr) * (l // tl) < 2:
        if tr % (2 * _SUBLANE) == 0:
            tr = tr // 2
        elif l % (2 * _LANE) == 0:
            tl = _pick_aligned_tile(l, _LANE, l // 2)
    return tr, tl


def desync(streams, *, prob=0.5, bitwidth=8, mode="bipolar",
           force_kernel=False):
    """Wrapper mirroring Desync(prob, bitwidth, mode).forward().

    streams: array of shape [2, N_STREAMS, L_WORDS]; the two bit streams are
             stacked along axis 0 and (preferably) bit-packed as uint32 along
             the last axis.

    The reference forward() is unimplemented (returns None), so the only
    defined behaviour is identity.  By default that identity is a zero-cost
    short-circuit (no kernel launch, no HBM traffic).  Pass
    `force_kernel=True` to route the data through the Pallas kernel -- the
    hook where real desync compute will land.

    NOTE: the kernel path sets input_output_aliases={0: 0}; callers that
    want true in-place reuse must donate the input
    (jax.jit(..., donate_argnums=...)), otherwise XLA inserts a defensive
    copy (correct, just not free).
    """
    del prob, bitwidth, mode  # parameters of the (unimplemented) reference

    if not force_kernel:
        # Perf review, highest-value change: the identity case has no defined
        # compute, so don't move 2x the array through HBM just to copy it.
        return streams

    assert streams.ndim == 3 and streams.shape[0] == 2
    two, n, lw = streams.shape
    itemsize = jnp.dtype(streams.dtype).itemsize

    # Flatten [2, N, Lw] -> [2N, Lw]: sublane axis >= 8 for modest N, lane
    # axis stays last (lane-dense).
    r = two * n
    flat = streams.reshape(r, lw)

    # Pad the lane axis to a multiple of 128 so stores are full-width vst,
    # not masked vst.msk partial stores.
    l_pad = -lw % _LANE
    if l_pad:
        flat = jnp.pad(flat, ((0, 0), (0, l_pad)))
    l = lw + l_pad

    tr, tl = _select_tiles(r, l, itemsize, _TILE_BYTE_BUDGET)
    grid = (r // tr, l // tl)
    spec = pl.BlockSpec((tr, tl), lambda i, j: (i, j))

    out = pl.pallas_call(
        _desync_kernel,
        grid=grid,
        in_specs=[spec],
        out_specs=spec,
        out_shape=jax.ShapeDtypeStruct((r, l), flat.dtype),
        # Output may reuse the input buffer when the caller donates it.
        input_output_aliases={0: 0},
        # Pure memory traffic: tell XLA's scheduler so it can overlap.
        cost_estimate=pl.CostEstimate(
            flops=0,
            transcendentals=0,
            bytes_accessed=2 * r * l * itemsize,
        ),
        compiler_params=pltpu.CompilerParams(
            # Independent tiles along both axes -> shardable across v7x's
            # 2 TensorCores.
            dimension_semantics=("parallel", "parallel"),
        ),
    )(flat)

    if l_pad:
        out = out[:, :lw]
    return out.reshape(two, n, lw)


def pack_bits_u32(bits_np):
    """Pack {0,1} bits along the last axis, 32 per uint32 word (LSB first).

    Host-side numpy packbits + uint32 view: avoids the 32x-expanded
    broadcast-multiply-reduce temporary of the naive device-side pack.
    """
    bits_np = np.asarray(bits_np, dtype=np.uint8)
    assert bits_np.shape[-1] % 32 == 0
    packed_u8 = np.packbits(bits_np, axis=-1, bitorder="little")
    packed_u8 = np.ascontiguousarray(packed_u8)
    return jnp.asarray(packed_u8.view(np.uint32))


if __name__ == "__main__":
    key = jax.random.PRNGKey(0)
    k_a, k_b = jax.random.split(key)

    # Small synthetic bit streams: 2 streams x 8 rows x 4096 bits each.
    # Packed 32 bits/lane -> uint32 words of lane width 128 (lane-dense).
    n_streams, stream_len_bits = 8, 4096
    a_bits = jax.random.bernoulli(k_a, 0.5, (n_streams, stream_len_bits))
    b_bits = jax.random.bernoulli(k_b, 0.5, (n_streams, stream_len_bits))

    stacked_bits = np.stack(
        [np.asarray(jax.device_get(a_bits)), np.asarray(jax.device_get(b_bits))],
        axis=0,
    )                                                    # [2, 8, 4096] bool
    packed = pack_bits_u32(stacked_bits)                 # [2, 8, 128] uint32

    # Host-side snapshot of the expected value (robust even if the input
    # buffer gets aliased/donated into the output on the kernel path).
    expected = np.asarray(jax.device_get(packed))

    # Default path: zero-cost identity short-circuit (no kernel launch).
    out_fast = desync(packed, prob=0.5, bitwidth=8, mode="bipolar")

    # Kernel path: exercises the Pallas identity kernel (future desync hook).
    out_kernel = desync(packed, prob=0.5, bitwidth=8, mode="bipolar",
                        force_kernel=True)
    jax.block_until_ready(out_kernel)

    # Sanity: both paths must be exact identities on the packed words.
    assert np.array_equal(np.asarray(jax.device_get(out_fast)), expected)
    assert np.array_equal(np.asarray(jax.device_get(out_kernel)), expected)

    print("KERNEL_OK")
</pallas_src>

<mosaic_0001>
module attributes {stable_mosaic.version = 11 : i64} {
  func.func @_desync_kernel(%arg0: i32, %arg1: i32, %arg2: memref<8x128xi32, #tpu.memory_space<vmem>>, %arg3: memref<8x128xi32, #tpu.memory_space<vmem>>) attributes {dimension_semantics = [#tpu.dimension_semantics<parallel>, #tpu.dimension_semantics<parallel>], iteration_bounds = array<i64: 2, 1>, scalar_prefetch = 0 : i64, scratch_operands = 0 : i64, tpu.core_type = #tpu.core_type<tc>, window_params = [{transform_indices = @transform_0, window_bounds = array<i64: 8, 128>}, {transform_indices = @transform_1, window_bounds = array<i64: 8, 128>}]} {
    %c0 = arith.constant 0 : index
    %c0_0 = arith.constant 0 : index
    %0 = vector.load %arg2[%c0, %c0_0] : memref<8x128xi32, #tpu.memory_space<vmem>>, vector<8x128xi32>
    %c0_1 = arith.constant 0 : index
    %c0_2 = arith.constant 0 : index
    %1 = vector.load %arg3[%c0_1, %c0_2] : memref<8x128xi32, #tpu.memory_space<vmem>>, vector<8x128xi32>
    tpu.vector_store %arg3[%c0_1, %c0_2], %0 {strides = array<i32>} : memref<8x128xi32, #tpu.memory_space<vmem>>, vector<8x128xi32>,
    return
  }
  func.func @transform_0(%arg0: i32, %arg1: i32) -> (i32, i32) {
    %c0_i32 = arith.constant 0 : i32
    return %arg0, %arg1 : i32, i32
  }
  func.func @transform_1(%arg0: i32, %arg1: i32) -> (i32, i32) {
    %c0_i32 = arith.constant 0 : i32
    return %arg0, %arg1 : i32, i32
  }
}

</mosaic_0001>

<llo_original>
// kernel: tpu_custom_call.1
$region0: #{tpu_custom_call.1}
  #allocation0 [shape = 'u32[]', space=smem, size = 0x4, offset = 0x4, fixed_abs, tag = 'smem constant byte address 0x4 - core index']
  #allocation1 [shape = 'u32[72,128]{1,0:T(1,128)}', space=vmem, size = 0x9000, scoped, tag = 'internal scratch']
  %s0 = inlined_call_operand.hbm [shape: u32[16,128], index: 0, kind: input, shape index: {}, may-alias: {0,1}]
  %s1 = inlined_call_operand.hbm [shape: u32[16,128], index: 1, kind: output, shape index: {}, may-alias: {0,1}]
  %s2 = sld [smem:[#allocation0]]
  $region41: #{tpu_custom_call.1} parent=0
    _
  %s4 = ssub.s32 1, %s2
  %s5 = scalar_select 0, %s4, %s2
  $region1: #{tpu_custom_call.1} parent=0
    #allocation2 [shape = 'u8[8192]{0}', space=vmem, size = 0x2000, scoped, tag = 'input window, operand 0']
    #allocation3 [shape = 's32[2]{0}', space=sflag, size = 0x8, scoped, tag = 'scoped memory for tpu_custom_call.1']
    #allocation4 [shape = 's32[2]{0}', space=sflag, size = 0x8, scoped, tag = 'scoped memory for tpu_custom_call.1']
    #allocation5 [shape = 'u8[8192]{0}', space=vmem, size = 0x2000, scoped, tag = 'output window, operand 0']
    %6 = vsyncpa [#allocation3], 0
    %s7 = scalar_lea.sflag [#allocation3], 1
    %8 = vsyncpa %s7, 0
    %9 = vsyncpa [#allocation4], 0
    %s10 = scalar_lea.sflag [#allocation4], 1
    %11 = vsyncpa %s10, 0
    loop: start=0, step=1, limit=4
    $region2: #{tpu_custom_call.1} parent=1 // loop_pre_header
      _
    $region3: #{tpu_custom_call.1} parent=1 // loop_header
      %s13 = sphi 0, %s17
      %p14 = scmp.ge.s32.totalorder %s13, 4
      %s20 = sphi 0, %s32
      %s21 = sphi 0, %s28
      %s22 = sphi 0, %s20
      %s23 = sphi 0, %s21
      %s24 = sphi 0, %s22
      %s25 = sphi 0, %s23
      %s37 = sphi 0, %s39
      %s40 = sphi 0, %s37
      %s41 = sphi 0, %s40
      %s57 = sphi 0, %s41
      %s65 = sphi 0, %s67
      %s68 = sphi 0, %s65
      %s69 = sphi 0, %s68
      %s85 = sphi 0, %s69
    $region4: #{tpu_custom_call.1} parent=1 // loop_header_branch
      %16 = sbr.rel (%p14) target = $region8
    $region5: #{tpu_custom_call.1} parent=1 // loop_body
      %s18 = ssub.s32 %s13, 1
      %s19 = ssub.s32 %s13, 2
      %s26 = sadd.s32 1, %s21
      %p27 = scmp.ge.s32.totalorder %s26, 1
      %s28 = scalar_select %p27, 0, %s26
      %s29 = sadd.s32 1, %s20
      %s30 = scalar_select %p27, %s29, %s20
      %p31 = scmp.ge.s32.totalorder %s30, 2
      %s32 = scalar_select %p31, 0, %s30
      %s33 = ssub.s32 %s20, %s32
      %s34 = ssub.s32 %s21, %s28
      %s35 = sor.u32 %s33, %s34
      %p36 = scmp.eq.s32.totalorder %s35, 0
      %s38 = sadd.s32 %s37, 1
      %s39 = scalar_select %p36, %s37, %s38
      %p42 = pneg %p36
      %p43 = scmp.eq.s32.totalorder %s13, 1
      %p44 = por %p42, %p43
      %p45 = scmp.ne.s32.totalorder %s37, %s40
      %p46 = scmp.eq.s32.totalorder %s13, 0
      %p47 = por %p45, %p46
      %p48 = scmp.ne.s32.totalorder %s37, %s40
      %p49 = scmp.eq.s32.totalorder %s18, 1
      %p50 = por %p48, %p49
      %p51 = scmp.ne.s32.totalorder %s40, %s41
      %p52 = scmp.eq.s32.totalorder %s18, 0
      %p53 = por %p51, %p52
      %p54 = scmp.ne.s32.totalorder %s40, %s41
      %p55 = scmp.eq.s32.totalorder %s19, 1
      %p56 = por %p54, %p55
      %p58 = scmp.ne.s32.totalorder %s41, %s57
      %p59 = scmp.eq.s32.totalorder %s19, 0
      %p60 = por %p58, %p59
      %s61 = ssub.s32 %s20, %s32
      %s62 = ssub.s32 %s21, %s28
      %s63 = sor.u32 %s61, %s62
      %p64 = scmp.eq.s32.totalorder %s63, 0
      %s66 = sadd.s32 %s65, 1
      %s67 = scalar_select %p64, %s65, %s66
      %p70 = pneg %p64
      %p71 = scmp.eq.s32.totalorder %s13, 1
      %p72 = por %p70, %p71
      %p73 = scmp.ne.s32.totalorder %s65, %s68
      %p74 = scmp.eq.s32.totalorder %s13, 0
      %p75 = por %p73, %p74
      %p76 = scmp.ne.s32.totalorder %s65, %s68
      %p77 = scmp.eq.s32.totalorder %s18, 1
      %p78 = por %p76, %p77
      %p79 = scmp.ne.s32.totalorder %s68, %s69
      %p80 = scmp.eq.s32.totalorder %s18, 0
      %p81 = por %p79, %p80
      %p82 = scmp.ne.s32.totalorder %s68, %s69
      %p83 = scmp.eq.s32.totalorder %s19, 1
      %p84 = por %p82, %p83
      %p86 = scmp.ne.s32.totalorder %s69, %s85
      %p87 = scmp.eq.s32.totalorder %s19, 0
      %p88 = por %p86, %p87
      %p89 = scmp.le.s32.totalorder 1, %s13
      %p90 = scmp.lt.s32.totalorder %s13, 3
      %p91 = pnand %p89, %p90
      %p92 = pneg %p91
      // Predicated region
      $region9: #{tpu_custom_call.1} parent=5 // pred_check
        _
      $region10: #{tpu_custom_call.1} parent=5 // pred_check_branch
        %94 = sbr.rel (%p91) target = $region12
      $region11: #{tpu_custom_call.1} parent=5 // pred_region
        %s95 = ssub.s32 %s13, 1
      $region12: #{tpu_custom_call.1} parent=5 // pred_fallthru
        _
      %p96 = scmp.lt.s32.totalorder %s13, 2
      // Predicated region
      $region13: #{tpu_custom_call.1} parent=5 // pred_check
        %p97 = pneg %p96
      $region14: #{tpu_custom_call.1} parent=5 // pred_check_branch
        %99 = sbr.rel (%p97) target = $region16
      $region15: #{tpu_custom_call.1} parent=5 // pred_region
        // Predicated region
        $region17: #{tpu_custom_call.1} parent=15 // pred_check
          %p100 = pneg %p47
        $region18: #{tpu_custom_call.1} parent=15 // pred_check_branch
          %102 = sbr.rel (%p100) target = $region20
        $region19: #{tpu_custom_call.1} parent=15 // pred_region
          %s103 = sand.u32 %s37, 1
          %s104 = scalar_lea.sflag [#allocation3], %s103
          %s105 = sand.u32 %s37, 1
          %s106 = smul.addr %s105, 8
          %s107 = scalar_lea.vmem [#allocation2], %s106
          %109 = vsyncadd %s104, 0
          %s110 = sadd.s32 %s21, %s20
          %s111 = smul.addr %s110, 8
          %s112 = scalar_lea.hbm %s0, %s111
          %s114 = sshll.u32 %s112, 4
          %s115 = int_to_ptr.hbm [resolvable:$true] %s114
          %s116 = sshll.u32 %s107, 4
          %s117 = int_to_ptr.vmem [resolvable:$true] %s116
          %119 = dma.hbm_to_vmem [thread:$0]  %s115, 128, %s117, %s104
        $region20: #{tpu_custom_call.1} parent=15 // pred_fallthru
          _
      $region16: #{tpu_custom_call.1} parent=5 // pred_fallthru
        _
      %p120 = scmp.le.s32.totalorder 1, %s13
      %p121 = scmp.lt.s32.totalorder %s13, 3
      %p122 = pnand %p120, %p121
      %p123 = pneg %p122
      // Predicated region
      $region21: #{tpu_custom_call.1} parent=5 // pred_check
        _
      $region22: #{tpu_custom_call.1} parent=5 // pred_check_branch
        %125 = sbr.rel (%p122) target = $region24
      $region23: #{tpu_custom_call.1} parent=5 // pred_region
        %s126 = ssub.s32 %s13, 1
        %s127 = sand.u32 %s40, 1
        %s128 = scalar_lea.sflag [#allocation3], %s127
        %s129 = sand.u32 %s40, 1
        %s130 = smul.addr %s129, 8
        %s131 = scalar_lea.vmem [#allocation2], %s130
        // Predicated region
        $region25: #{tpu_custom_call.1} parent=23 // pred_check
          %p132 = pneg %p53
        $region26: #{tpu_custom_call.1} parent=23 // pred_check_branch
          %134 = sbr.rel (%p132) target = $region28
        $region27: #{tpu_custom_call.1} parent=23 // pred_region
          %136 = dma.done %s128, 128
        $region28: #{tpu_custom_call.1} parent=23 // pred_fallthru
          _
        %s137 = sand.u32 %s40, 1
        %s138 = scalar_lea.sflag [#allocation3], %s137
        %s139 = sand.u32 %s40, 1
        %s140 = smul.addr %s139, 8
        %s141 = scalar_lea.vmem [#allocation2], %s140
        %p142 = pneg %p53
        %p143 = pneg %p50
        %p144 = pneg %p81
        %p145 = pneg %p78
        %s146 = sand.u32 %s68, 1
        %s147 = scalar_lea.sflag [#allocation4], %s146
        %s148 = sand.u32 %s68, 1
        %s149 = smul.addr %s148, 8
        %s150 = scalar_lea.vmem [#allocation5], %s149
        %v151 = vld [vmem:[%s131] sm:$0xff]
        %152 = vst [vmem:[%s150] sm:$0xff] %v151
        %s153 = sand.u32 %s68, 1
        %s154 = scalar_lea.sflag [#allocation4], %s153
        %s155 = sand.u32 %s68, 1
        %s156 = smul.addr %s155, 8
        %s157 = scalar_lea.vmem [#allocation5], %s156
        // Predicated region
        $region29: #{tpu_custom_call.1} parent=23 // pred_check
          %p158 = pneg %p78
        $region30: #{tpu_custom_call.1} parent=23 // pred_check_branch
          %160 = sbr.rel (%p158) target = $region32
        $region31: #{tpu_custom_call.1} parent=23 // pred_region
          %162 = vsyncadd %s154, 0
          %s163 = sadd.s32 %s23, %s22
          %s164 = smul.addr %s163, 8
          %s165 = scalar_lea.hbm %s1, %s164
          %s167 = sshll.u32 %s157, 4
          %s168 = int_to_ptr.vmem [resolvable:$true] %s167
          %s169 = sshll.u32 %s165, 4
          %s170 = int_to_ptr.hbm [resolvable:$true] %s169
          %172 = dma.vmem_to_hbm [thread:$0]  %s168, 128, %s170, %s154
        $region32: #{tpu_custom_call.1} parent=23 // pred_fallthru
          _
      $region24: #{tpu_custom_call.1} parent=5 // pred_fallthru
        _
      %p173 = scmp.le.s32.totalorder 2, %s13
      // Predicated region
      $region33: #{tpu_custom_call.1} parent=5 // pred_check
        %p174 = pneg %p173
      $region34: #{tpu_custom_call.1} parent=5 // pred_check_branch
        %176 = sbr.rel (%p174) target = $region36
      $region35: #{tpu_custom_call.1} parent=5 // pred_region
        %s177 = ssub.s32 %s13, 2
        // Predicated region
        $region37: #{tpu_custom_call.1} parent=35 // pred_check
          %p178 = pneg %p84
        $region38: #{tpu_custom_call.1} parent=35 // pred_check_branch
          %180 = sbr.rel (%p178) target = $region40
        $region39: #{tpu_custom_call.1} parent=35 // pred_region
          %s181 = sand.u32 %s69, 1
          %s182 = scalar_lea.sflag [#allocation4], %s181
          %s183 = sand.u32 %s69, 1
          %s184 = smul.addr %s183, 8
          %s185 = scalar_lea.vmem [#allocation5], %s184
          %187 = dma.done %s182, 128
        $region40: #{tpu_custom_call.1} parent=35 // pred_fallthru
          _
      $region36: #{tpu_custom_call.1} parent=5 // pred_fallthru
        _
    $region6: #{tpu_custom_call.1} parent=1 // loop_footer
      %s17 = sadd.s32 1, %s13
    $region7: #{tpu_custom_call.1} parent=1 // loop_footer_branch
      %12 = sbr.rel target = $region3
    $region8: #{tpu_custom_call.1} parent=1 // loop_exit
      _
    %188 = vsyncpa [#allocation3], 1
    %s189 = scalar_lea.sflag [#allocation3], 1
    %190 = vsyncpa %s189, 1
    %191 = vsyncpa [#allocation4], 1
    %s192 = scalar_lea.sflag [#allocation4], 1
    %193 = vsyncpa %s192, 1

</llo_original>
